<compile_context>
chip_gen: v7x
topology: tpu7x:2x2x1
jax: 0.10.0
libtpu: 0.0.40
codegen_flags: <defaults>
</compile_context>

<pallas_src>
import functools

import jax
import jax.numpy as jnp
from jax import lax
from jax.experimental import pallas as pl
from jax.experimental.pallas import tpu as pltpu

_LN_EPS = 1e-5
_BN_EPS = 1e-5
_SQRT_HALF = 0.7071067811865476
_INV9 = 1.0 / 9.0


# ----------------------------------------------------------------------------
# Trace-time hardware detection: compute dtype + VMEM budget per chip.
# ----------------------------------------------------------------------------
@functools.lru_cache(maxsize=None)
def _tpu_generation() -> int:
    try:
        kind = jax.devices()[0].device_kind.lower()
    except Exception:
        return 0
    for g in (7, 6, 5, 4, 3, 2):
        if f"v{g}" in kind or f"tpu{g}" in kind:
            return g
    return 0


def _chip_config():
    gen = _tpu_generation()
    # bf16 VPU/EUP is native on v6e and later; keep f32 elementwise on v5e & older.
    cdt = jnp.bfloat16 if gen >= 6 else jnp.float32
    if gen >= 7:
        vmem_limit = 40 * 1024 * 1024      # v7x: 64 MiB physical per TC
    elif gen in (5, 6):
        vmem_limit = 64 * 1024 * 1024      # v5e/v6e: 128 MiB physical
    else:
        vmem_limit = None                  # unknown / older: compiler default
    return gen, cdt, vmem_limit


@functools.lru_cache(maxsize=None)
def _roll_plus_one_is_prev() -> bool:
    """True iff pltpu.roll(x, 1, axis=1)[..., p] == x[..., p-1] (jnp.roll order)."""
    def k(x_ref, o_ref):
        o_ref[...] = pltpu.roll(x_ref[...], 1, axis=1)
    x = jnp.broadcast_to(jnp.arange(128, dtype=jnp.float32), (8, 128))
    y = pl.pallas_call(k, out_shape=jax.ShapeDtypeStruct((8, 128), jnp.float32))(x)
    return bool(y[0, 1] == x[0, 0])


# ----------------------------------------------------------------------------
# Elementwise helpers (run in the per-chip compute dtype).
# ----------------------------------------------------------------------------
def _erf(z):
    # Abramowitz & Stegun 7.1.26, |err| < 1.5e-7 in f32 (exact-GELU quality).
    # The divide is an approx EUP reciprocal (kernel is VALU-bound, EUP has slack);
    # the reciprocal itself is done in f32 (Mosaic's reciprocal path), casts are
    # no-ops when the compute dtype is f32.
    a1, a2, a3, a4, a5 = 0.254829592, -0.284496736, 1.421413741, -1.453152027, 1.061405429
    p = 0.3275911
    one = jnp.asarray(1.0, z.dtype)
    sgn = jnp.where(z >= 0.0, one, -one)
    az = z * sgn
    t = pl.reciprocal((1.0 + p * az).astype(jnp.float32), approx=True).astype(z.dtype)
    poly = ((((a5 * t + a4) * t + a3) * t + a2) * t + a1) * t
    return sgn * (1.0 - poly * jnp.exp(-az * az))


def _gelu(x):
    # matches torch F.gelu default (erf-based, not the tanh approximation)
    # TODO(synk): a tanh-approx GELU (EUP tanh) would cut ~40% more VALU work on
    # v5e but slightly changes the function vs the torch reference.
    return 0.5 * x * (1.0 + _erf(x * _SQRT_HALF))


def _layernorm_c(x, gamma_col, beta_col):
    # LayerNorm over the channel axis (axis 0 of the (C, P) layout); f32 stats.
    mu = jnp.mean(x, axis=0, keepdims=True)
    d = x - mu
    var = jnp.mean(d * d, axis=0, keepdims=True)
    return d * lax.rsqrt(var + _LN_EPS) * gamma_col + beta_col


# ----------------------------------------------------------------------------
# Kernel.
# ----------------------------------------------------------------------------
def msmamba_kernel(x_ref, masks_ref, wf_ref, wb_ref, fwmt_ref, bwmt_ref,
                   ow_ref, vecs_ref, out_ref, *, width, cdt, plus_one_is_prev):
    # x_ref:     (C, P)   P = Bblk*H*W positions on the lane axis (f32)
    # masks:     (6, P)   0/1 boundary masks (cdt) for roll-based conv / pool
    # wf/wb:     (C, 3)   depthwise conv1d taps (cdt)
    # fwmt/bwmt: (C, C)   fproj_w @ (B@C.T)^T   /   2 * bproj_w @ (B@C.T)^T  (cdt)
    # ow:        (C, C)   0.1 * out_proj weight (cdt)
    # vecs:      (C, 14)  packed per-channel vectors (f32; see wrapper)
    P = x_ref.shape[1]
    # static roll shifts: s_prev brings x[p-1] to lane p, s_next brings x[p+1]
    s_prev = 1 if plus_one_is_prev else P - 1
    s_next = P - s_prev
    s_up = width if plus_one_is_prev else P - width      # row above (h-1)
    s_down = P - s_up                                     # row below (h+1)

    x32 = x_ref[...]                       # single f32 load, reused for residual
    x = x32.astype(cdt)
    masks = masks_ref[...]
    wf = wf_ref[...]
    wb = wb_ref[...]
    vecs = vecs_ref[...]

    # depthwise Conv1d(k=3, pad=1, groups=dim, bias=False) along the flattened
    # H*W axis: XLU lane rotations + zero masks at each element's sequence ends.
    x_prev = pltpu.roll(x, s_prev, axis=1) * masks[0:1, :]
    x_next = pltpu.roll(x, s_next, axis=1) * masks[1:2, :]

    def conv_bn_gelu2(w, bn_scale, bn_shift):
        y = w[:, 0:1] * x_prev + w[:, 1:2] * x + w[:, 2:3] * x_next
        y = y * bn_scale + bn_shift         # eval-mode BatchNorm1d (folded)
        return _gelu(_gelu(y))              # GELU in Sequential + F.gelu in forward()

    yf = conv_bn_gelu2(wf, vecs[:, 0:1].astype(cdt), vecs[:, 1:2].astype(cdt))
    yb = conv_bn_gelu2(wb, vecs[:, 2:3].astype(cdt), vecs[:, 3:4].astype(cdt))

    # forward branch.  selective_scan's channel mix (B@C.T) and forward_proj's
    # Linear are both channel matmuls; the 3x3 avg-pool acts only on positions
    # so it commutes with them -> both matmuls are folded into one weight
    # (fwmt) in the wrapper.  No lane-concat copy, one MXU pass per branch.
    zf = jnp.dot(fwmt_ref[...], yf, preferred_element_type=jnp.float32)   # (C,P) f32
    zfc = zf.astype(cdt)
    # avg_pool2d(3, stride=1, padding=1), count_include_pad=True -> divisor 9,
    # separable lane rotations + H/W boundary masks.
    sw = (zfc + pltpu.roll(zfc, s_prev, axis=1) * masks[2:3, :]
              + pltpu.roll(zfc, s_next, axis=1) * masks[3:4, :])
    pooled = (sw + pltpu.roll(sw, s_up, axis=1) * masks[4:5, :]
                 + pltpu.roll(sw, s_down, axis=1) * masks[5:6, :])
    xf = zf + pooled.astype(jnp.float32) * _INV9 + vecs[:, 4:5]
    xf = _gelu(_layernorm_c(xf, vecs[:, 5:6], vecs[:, 6:7]).astype(cdt))

    # backward branch: flip -> mix -> flip == forward mix (mix is pointwise in
    # position); adaptive_avg_pool2d to the same size is identity, so
    # x_b + pool(x_b) == 2*x_b; the 2 and backward_proj are folded into bwmt.
    zb = jnp.dot(bwmt_ref[...], yb, preferred_element_type=jnp.float32)   # (C,P) f32
    xb = _gelu(_layernorm_c(zb + vecs[:, 7:8], vecs[:, 8:9], vecs[:, 9:10]).astype(cdt))

    # combine: sigmoid ssm weight (precomputed per channel), LayerNorm,
    # out_proj (0.1 residual scale folded into weight/bias), residual add.
    y = (xf + xb) * vecs[:, 10:11].astype(cdt)
    y = _layernorm_c(y.astype(jnp.float32), vecs[:, 11:12], vecs[:, 12:13])
    y = jnp.dot(ow_ref[...], y.astype(cdt),
                preferred_element_type=jnp.float32) + vecs[:, 13:14]
    out_ref[...] = x32 + y                  # identity + 0.1 * out (0.1 folded)


# ----------------------------------------------------------------------------
# Tile selection: largest batch chunk whose tile fits the VMEM budget.
# ----------------------------------------------------------------------------
def _pick_bblk(B, L, bytes_per_lane, vmem_budget, want_multi_step):
    divisors = [b for b in range(1, B + 1) if B % b == 0]
    aligned = [b for b in divisors if (b * L) % 128 == 0]
    fitting = [b for b in aligned if b * L * bytes_per_lane <= vmem_budget]
    if fitting:
        if want_multi_step:
            even = [b for b in fitting if (B // b) >= 2 and (B // b) % 2 == 0]
            multi = [b for b in fitting if (B // b) >= 2]
            if even:
                return max(even)
            if multi:
                return max(multi)
        return max(fitting)
    if aligned:
        return min(aligned)    # smallest lane-dense tile (over budget: best effort)
    # no divisor gives lane-dense columns: one full-width block (block == array
    # extents is always legal, at the cost of lane-masked stores).
    return B


# ----------------------------------------------------------------------------
# Parameters (matching a fresh, eval-mode torch MSMambaBlock layout).
# ----------------------------------------------------------------------------
def init_params(key, dim, d_state):
    ks = jax.random.split(key, 21)
    sc = 1.0 / (dim ** 0.5)
    p = {}
    p["A"] = jax.random.normal(ks[0], (dim, d_state), jnp.float32)
    p["B"] = jax.random.normal(ks[1], (dim, d_state), jnp.float32)
    p["C"] = jax.random.normal(ks[2], (dim, d_state), jnp.float32)
    p["D"] = jnp.zeros((dim,), jnp.float32)
    # depthwise conv taps stored (channel, k): columns multiply x[l-1], x[l], x[l+1]
    p["conv_f_w"] = 0.3 * jax.random.normal(ks[3], (dim, 3), jnp.float32)
    p["conv_b_w"] = 0.3 * jax.random.normal(ks[4], (dim, 3), jnp.float32)
    p["bn_f_gamma"] = 1.0 + 0.1 * jax.random.normal(ks[5], (dim,), jnp.float32)
    p["bn_f_beta"] = 0.1 * jax.random.normal(ks[6], (dim,), jnp.float32)
    p["bn_b_gamma"] = 1.0 + 0.1 * jax.random.normal(ks[7], (dim,), jnp.float32)
    p["bn_b_beta"] = 0.1 * jax.random.normal(ks[8], (dim,), jnp.float32)
    p["bn_mean"] = jnp.zeros((dim,), jnp.float32)   # fresh-module running stats
    p["bn_var"] = jnp.ones((dim,), jnp.float32)
    # Linear weights stored (out, in), applied as W @ x + b[:, None]
    p["fproj_w"] = sc * jax.random.normal(ks[9], (dim, dim), jnp.float32)
    p["fproj_b"] = 0.1 * jax.random.normal(ks[10], (dim,), jnp.float32)
    p["fln_g"] = 1.0 + 0.1 * jax.random.normal(ks[11], (dim,), jnp.float32)
    p["fln_b"] = 0.1 * jax.random.normal(ks[12], (dim,), jnp.float32)
    p["bproj_w"] = sc * jax.random.normal(ks[13], (dim, dim), jnp.float32)
    p["bproj_b"] = 0.1 * jax.random.normal(ks[14], (dim,), jnp.float32)
    p["bln_g"] = 1.0 + 0.1 * jax.random.normal(ks[15], (dim,), jnp.float32)
    p["bln_b"] = 0.1 * jax.random.normal(ks[16], (dim,), jnp.float32)
    p["norm_g"] = 1.0 + 0.1 * jax.random.normal(ks[17], (dim,), jnp.float32)
    p["norm_b"] = 0.1 * jax.random.normal(ks[18], (dim,), jnp.float32)
    p["out_w"] = sc * jax.random.normal(ks[19], (dim, dim), jnp.float32)
    p["out_b"] = 0.1 * jax.random.normal(ks[20], (dim,), jnp.float32)
    return p


# ----------------------------------------------------------------------------
# Wrapper.
# ----------------------------------------------------------------------------
def msmamba_forward(x_nchw, params):
    """x_nchw: (B, C, H, W) with C == dim. Returns (B, C, H, W), float32."""
    B, C, H, W = x_nchw.shape
    dim = C
    L = H * W
    gen, cdt, vmem_limit = _chip_config()
    esize = jnp.dtype(cdt).itemsize

    # per-lane VMEM estimate: double-buffered in+out f32 (16*C), double-buffered
    # (6,P) masks, and ~8 live (C,P) temporaries inside the body (counted as f32
    # to stay conservative).  Budget the tile against half the scoped VMEM limit.
    bytes_per_lane = 16 * C + 12 * esize + 8 * C * 4
    vmem_budget = (vmem_limit if vmem_limit is not None else 16 * 1024 * 1024) // 2
    Bblk = _pick_bblk(B, L, bytes_per_lane, vmem_budget, want_multi_step=(gen >= 7))
    P = Bblk * L
    n_steps = B // Bblk

    # (B, C, H, W) -> (C, B*L): channels on sublanes, positions on lanes.
    x2d = jnp.transpose(x_nchw.reshape(B, C, L), (1, 0, 2)).reshape(C, B * L)
    x2d = x2d.astype(jnp.float32)

    hi = lax.Precision.HIGHEST
    # ---- parameter folding: one-time wrapper/XLA work outside the grid loop ----
    bnf_scale = params["bn_f_gamma"] * lax.rsqrt(params["bn_var"] + _BN_EPS)
    bnf_shift = params["bn_f_beta"] - params["bn_mean"] * bnf_scale
    bnb_scale = params["bn_b_gamma"] * lax.rsqrt(params["bn_var"] + _BN_EPS)
    bnb_shift = params["bn_b_beta"] - params["bn_mean"] * bnb_scale

    m = jnp.matmul(params["B"], params["C"].T, precision=hi)     # (dim, dim)
    mt = m.T                                                     # mix is mt @ x
    # sigmoid(D + A @ 1_{d_state} + (B C^T) @ 1_{dim})
    ssm_w = jax.nn.sigmoid(params["D"] + params["A"].sum(-1) + m.sum(-1))

    # fold selective_scan's channel mix into the branch projections (the 3x3
    # avg-pool only acts on positions, so it commutes with channel matmuls),
    # the x2 from the adaptive-pool identity into bwmt, the 0.1 residual scale
    # into out_proj weight/bias.
    fwmt = jnp.matmul(params["fproj_w"], mt, precision=hi)
    bwmt = 2.0 * jnp.matmul(params["bproj_w"], mt, precision=hi)
    ow = 0.1 * params["out_w"]
    ob = 0.1 * params["out_b"]

    vecs = jnp.stack(
        [bnf_scale, bnf_shift, bnb_scale, bnb_shift,
         params["fproj_b"], params["fln_g"], params["fln_b"],
         params["bproj_b"], params["bln_g"], params["bln_b"],
         ssm_w, params["norm_g"], params["norm_b"], ob],
        axis=1).astype(jnp.float32)                              # (dim, 14)

    # 0/1 boundary masks for the roll-based conv / pool (identical per tile,
    # because every tile starts at a batch-element boundary).
    pos = jnp.arange(P)
    l = pos % L                    # position within one batch element (h*W + w)
    w = l % W                      # image column
    masks = jnp.stack(
        [l > 0, l < L - 1,         # conv1d zero-pad boundaries (flattened H*W)
         w > 0, w < W - 1,         # pool W-direction boundaries
         l >= W, l < L - W],       # pool H-direction boundaries
        axis=0).astype(cdt)                                      # (6, P)

    def const2d(shape):
        # Grid-invariant full-array block.
        # TODO(synk): single-buffer these (pipeline_mode=pl.Buffered(1)) once
        # verified on the target jax; only the (6,P) masks scale with P and they
        # are already stored in the (bf16) compute dtype on v6e/v7x.
        return pl.BlockSpec(shape, lambda i: (0, 0))

    cost = pl.CostEstimate(
        flops=int(6 * dim * dim * B * L + 200 * dim * B * L),
        transcendentals=int(12 * dim * B * L),
        bytes_accessed=int(8 * dim * B * L
                           + n_steps * (esize * (6 * P + 3 * dim * dim + 6 * dim)
                                        + 4 * 14 * dim)),
    )

    kernel = functools.partial(
        msmamba_kernel, width=W, cdt=cdt,
        plus_one_is_prev=_roll_plus_one_is_prev())

    out2d = pl.pallas_call(
        kernel,
        out_shape=jax.ShapeDtypeStruct((C, B * L), jnp.float32),
        grid_spec=pltpu.PrefetchScalarGridSpec(
            num_scalar_prefetch=0,
            grid=(n_steps,),
            in_specs=[
                pl.BlockSpec((C, P), lambda i: (0, i)),    # x: Bblk elems / step
                const2d((6, P)),                           # boundary masks
                const2d((dim, 3)), const2d((dim, 3)),      # conv taps fwd / bwd
                const2d((dim, dim)), const2d((dim, dim)),  # fwmt, bwmt (folded)
                const2d((dim, dim)),                       # out_proj (*0.1)
                const2d((dim, 14)),                        # packed per-channel vecs
            ],
            out_specs=pl.BlockSpec((C, P), lambda i: (0, i)),
        ),
        compiler_params=pltpu.CompilerParams(
            dimension_semantics=("parallel",),
            vmem_limit_bytes=vmem_limit),
        cost_estimate=cost,
    )(x2d, masks,
      params["conv_f_w"].astype(cdt), params["conv_b_w"].astype(cdt),
      fwmt.astype(cdt), bwmt.astype(cdt), ow.astype(cdt), vecs)

    # (C, B*L) -> (B, C, H, W)
    return jnp.transpose(out2d.reshape(C, B, L), (1, 0, 2)).reshape(B, C, H, W)


# ----------------------------------------------------------------------------
# Pure-JAX (non-Pallas) f32 reference of MSMambaBlock.forward (eval mode).
# ----------------------------------------------------------------------------
def msmamba_forward_ref(x, params):
    B, C, H, W = x.shape
    hi = lax.Precision.HIGHEST
    xr = x.reshape(B, C, H * W)

    def conv_branch(w, gamma, beta):
        xpad = jnp.pad(xr, ((0, 0), (0, 0), (1, 1)))
        y = (w[None, :, 0:1] * xpad[:, :, :-2]
             + w[None, :, 1:2] * xpad[:, :, 1:-1]
             + w[None, :, 2:3] * xpad[:, :, 2:])
        scale = gamma * lax.rsqrt(params["bn_var"] + _BN_EPS)
        shift = beta - params["bn_mean"] * scale
        y = y * scale[None, :, None] + shift[None, :, None]
        y = jax.nn.gelu(y, approximate=False)        # nn.GELU in the Sequential
        return jax.nn.gelu(y, approximate=False)     # F.gelu in forward()

    yf = conv_branch(params["conv_f_w"], params["bn_f_gamma"], params["bn_f_beta"])
    yb = conv_branch(params["conv_b_w"], params["bn_b_gamma"], params["bn_b_beta"])

    m = jnp.matmul(params["B"], params["C"].T, precision=hi)
    xf = jnp.einsum("bcd,ce->bed", yf, m, precision=hi)
    xb = jnp.flip(jnp.einsum("bcd,ce->bed", jnp.flip(yb, -1), m, precision=hi), -1)
    xf = xf.reshape(B, C, H, W)
    xb = xb.reshape(B, C, H, W)

    xfp = jnp.pad(xf, ((0, 0), (0, 0), (1, 1), (1, 1)))
    pooled = sum(xfp[:, :, i:i + H, j:j + W] for i in range(3) for j in range(3)) / 9.0
    xf = xf + pooled              # avg_pool2d(3, 1, 1), count_include_pad=True
    xb = xb + xb                  # adaptive_avg_pool2d to same size == identity

    def proj(z, wk, bk, gk, betak):
        z = jnp.transpose(z, (0, 2, 3, 1))            # BHWC
        z = jnp.matmul(z, params[wk].T, precision=hi) + params[bk]
        mu = z.mean(-1, keepdims=True)
        var = ((z - mu) ** 2).mean(-1, keepdims=True)
        z = (z - mu) * lax.rsqrt(var + _LN_EPS) * params[gk] + params[betak]
        return jax.nn.gelu(z, approximate=False)

    xf = proj(xf, "fproj_w", "fproj_b", "fln_g", "fln_b")
    xb = proj(xb, "bproj_w", "bproj_b", "bln_g", "bln_b")

    y = xf + xb
    ssm_w = jax.nn.sigmoid(params["D"] + params["A"].sum(-1) + m.sum(-1))
    y = y * ssm_w
    mu = y.mean(-1, keepdims=True)
    var = ((y - mu) ** 2).mean(-1, keepdims=True)
    y = (y - mu) * lax.rsqrt(var + _LN_EPS) * params["norm_g"] + params["norm_b"]
    y = jnp.matmul(y, params["out_w"].T, precision=hi) + params["out_b"]
    y = jnp.transpose(y, (0, 3, 1, 2))
    return x + 0.1 * y


if __name__ == "__main__":
    dim, d_state = 32, 8
    B, H, W = 4, 16, 16

    key = jax.random.PRNGKey(0)
    kx, kp = jax.random.split(key)
    x = jax.random.normal(kx, (B, dim, H, W), jnp.float32)   # NCHW like torch
    params = init_params(kp, dim, d_state)

    _roll_plus_one_is_prev()          # resolve the rotate convention up front

    fwd = jax.jit(msmamba_forward)
    out = jax.block_until_ready(fwd(x, params))
    assert out.shape == (B, dim, H, W) and out.dtype == jnp.float32
    assert bool(jnp.isfinite(out).all())

    # Tolerance gate for the approx-reciprocal / bf16-elementwise choices
    # against a pure-JAX f32 reference of the (eval-mode) torch module.
    ref = msmamba_forward_ref(x, params)
    max_err = float(jnp.max(jnp.abs(out - ref)))
    tol = 6e-2 if _chip_config()[1] == jnp.bfloat16 else 2e-2
    assert max_err < tol, f"max |out - ref| = {max_err} exceeds {tol}"

    print("KERNEL_OK")
</pallas_src>

<mosaic_0001>
module attributes {stable_mosaic.version = 11 : i64} {
  func.func @k(%arg0: memref<8x128xf32, #tpu.memory_space<vmem>>, %arg1: memref<8x128xf32, #tpu.memory_space<vmem>>) attributes {dimension_semantics = [], scalar_prefetch = 0 : i64, scratch_operands = 0 : i64, tpu.core_type = #tpu.core_type<tc>} {
    %c0 = arith.constant 0 : index
    %c0_0 = arith.constant 0 : index
    %0 = vector.load %arg0[%c0, %c0_0] : memref<8x128xf32, #tpu.memory_space<vmem>>, vector<8x128xf32>
    %c1_i32 = arith.constant 1 : i32
    %1 = tpu.dynamic_rotate %0 by %c1_i32 dim 1 : vector<8x128xf32>, i32 -> vector<8x128xf32>
    %c0_1 = arith.constant 0 : index
    %c0_2 = arith.constant 0 : index
    %2 = vector.load %arg1[%c0_1, %c0_2] : memref<8x128xf32, #tpu.memory_space<vmem>>, vector<8x128xf32>
    tpu.vector_store %arg1[%c0_1, %c0_2], %1 {strides = array<i32>} : memref<8x128xf32, #tpu.memory_space<vmem>>, vector<8x128xf32>,
    return
  }
}

</mosaic_0001>

<llo_original>
// kernel: tpu_custom_call.1
$region0: #{tpu_custom_call.1}
  #allocation0 [shape = 'u32[]', space=smem, size = 0x4, offset = 0x4, fixed_abs, tag = 'smem constant byte address 0x4 - core index']
  #allocation1 [shape = 'u32[144,128]{1,0:T(1,128)}', space=vmem, size = 0x12000, scoped, tag = 'internal scratch']
  %s0 = inlined_call_operand.hbm [shape: f32[8,128], index: 0, kind: input, shape index: {}]
  %s1 = inlined_call_operand.hbm [shape: f32[8,128], index: 1, kind: output, shape index: {}]
  %s2 = sld [smem:[#allocation0]]
  $region18: #{tpu_custom_call.1} parent=0
    _
  %s4 = ssub.s32 1, %s2
  %s5 = scalar_select 0, %s4, %s2
  $region1: #{tpu_custom_call.1} parent=0
    #allocation2 [shape = 'u8[4096]{0}', space=vmem, size = 0x1000, scoped, tag = 'input window, operand 0, single buffered']
    #allocation3 [shape = 's32[1]{0}', space=sflag, size = 0x4, scoped, tag = 'scoped memory for tpu_custom_call.1']
    #allocation4 [shape = 's32[1]{0}', space=sflag, size = 0x4, scoped, tag = 'scoped memory for tpu_custom_call.1']
    #allocation5 [shape = 'u8[4096]{0}', space=vmem, size = 0x1000, scoped, tag = 'output window, operand 0, single buffered']
    %6 = vsyncpa [#allocation3], 0
    %7 = vsyncpa [#allocation4], 0
    // Predicated region
    $region2: #{tpu_custom_call.1} parent=1 // pred_check
      _
    $region3: #{tpu_custom_call.1} parent=1 // pred_check_branch
      %9 = sbr.rel (0) target = $region5
    $region4: #{tpu_custom_call.1} parent=1 // pred_region
      %s11 = ssub.s32 128, 128
      %12 = vsyncadd [#allocation3], %s11
      %s14 = sshll.u32 [#allocation2], 4
      %s15 = int_to_ptr.vmem [resolvable:$true] %s14
      %17 = dma.hbm_to_vmem [thread:$0]  %s0, 128, %s15, [#allocation3]
    $region5: #{tpu_custom_call.1} parent=1 // pred_fallthru
      _
    // Predicated region
    $region6: #{tpu_custom_call.1} parent=1 // pred_check
      _
    $region7: #{tpu_custom_call.1} parent=1 // pred_check_branch
      %19 = sbr.rel (0) target = $region9
    $region8: #{tpu_custom_call.1} parent=1 // pred_region
      %20 = dma.done [#allocation3], 128
    $region9: #{tpu_custom_call.1} parent=1 // pred_fallthru
      _
    %v21 = vld [vmem:[#allocation2] sm:$0xff]
    %22 = vrot.lane.b32.xlu0 %v21, 1
    %v23 = vpop.permute.xlu0 %22
    %24 = vst [vmem:[#allocation5] sm:$0xff] %v23
    // Predicated region
    $region10: #{tpu_custom_call.1} parent=1 // pred_check
      _
    $region11: #{tpu_custom_call.1} parent=1 // pred_check_branch
      %26 = sbr.rel (0) target = $region13
    $region12: #{tpu_custom_call.1} parent=1 // pred_region
      %s28 = ssub.s32 128, 128
      %29 = vsyncadd [#allocation4], %s28
      %s31 = sshll.u32 [#allocation5], 4
      %s32 = int_to_ptr.vmem [resolvable:$true] %s31
      %34 = dma.vmem_to_hbm [thread:$0]  %s32, 128, %s1, [#allocation4]
    $region13: #{tpu_custom_call.1} parent=1 // pred_fallthru
      _
    // Predicated region
    $region14: #{tpu_custom_call.1} parent=1 // pred_check
      _
    $region15: #{tpu_custom_call.1} parent=1 // pred_check_branch
      %36 = sbr.rel (0) target = $region17
    $region16: #{tpu_custom_call.1} parent=1 // pred_region
      %37 = dma.done [#allocation4], 128
    $region17: #{tpu_custom_call.1} parent=1 // pred_fallthru
      _
    %38 = vsyncpa [#allocation3], 1
    %39 = vsyncpa [#allocation4], 1

</llo_original>
